<compile_context>
chip_gen: v6e
topology: v6e:2x2x1
jax: 0.10.0
libtpu: 0.0.40
codegen_flags: <defaults>
</compile_context>

<pallas_src>
import functools

import jax
import jax.numpy as jnp
from jax.experimental import pallas as pl
from jax.experimental.pallas import tpu as pltpu


# ---------------------------------------------------------------------------
# Pass A: tiled sum over the first `eff_len` positions of the L axis.
# ---------------------------------------------------------------------------
def _pool_sum_kernel(data_ref, sum_ref, *, l_tile, eff_len):
    l = pl.program_id(1)

    @pl.when(l == 0)
    def _():
        sum_ref[...] = jnp.zeros_like(sum_ref)

    x = data_ref[...]                                        # (1, C, l_tile), native dtype
    # Mask (instead of slicing) positions >= eff_len: handles the AvgPool1d
    # trim AND any partial last tile without materializing a VMEM copy.
    pos = l * l_tile + jax.lax.broadcasted_iota(jnp.int32, x.shape, 2)
    xm = jnp.where(pos < eff_len, x.astype(jnp.float32), 0.0)
    sum_ref[...] += jnp.sum(xm, axis=2, keepdims=True)       # (1, C, 1) f32 accumulator


# ---------------------------------------------------------------------------
# Pass B: elementwise gate * data in the data's native dtype.
# ---------------------------------------------------------------------------
def _gate_mul_kernel(gate_ref, data_ref, out_ref):
    out_ref[...] = gate_ref[...] * data_ref[...]             # (1,C,1) * (1,C,l_tile)


def _pick_l_tile(L, C, itemsize, max_tile_bytes=2 * 1024 * 1024):
    """Largest multiple-of-128 L tile whose (1, C, tile) buffer fits the budget."""
    max_l = max(128, (max_tile_bytes // max(C * itemsize, 1)) // 128 * 128)
    return L if L <= max_l else int(max_l)


@functools.partial(jax.jit, static_argnames=("out_channels", "mean_pool", "l_tile"))
def global_context(data, w1, b1, w2, b2, *, out_channels, mean_pool=True,
                   l_tile=None):
    """data: (B, C, L); w1: (C//8, C); b1: (C//8,); w2: (C, C//8); b2: (C,)."""
    B, C, L = data.shape
    K = out_channels
    if w2.shape[0] != C:
        raise ValueError("broadcast multiply requires out_channels == in_channels")
    n_win = L // K
    eff_len = (n_win * K) if mean_pool else K
    if eff_len == 0 or L < K:
        # PyTorch AvgPool1d would error on an empty pooling window.
        raise ValueError("sequence length L must be >= out_channels (pool kernel size)")

    itemsize = jnp.dtype(data.dtype).itemsize
    if l_tile is None:
        l_tile = _pick_l_tile(L, C, itemsize)

    n_l_red = pl.cdiv(eff_len, l_tile)       # reduction only reads up to eff_len
    n_l_all = pl.cdiv(L, l_tile)

    # ---- Pass A: per-(B, C) sum over the first eff_len positions ----------
    sums = pl.pallas_call(
        functools.partial(_pool_sum_kernel, l_tile=l_tile, eff_len=eff_len),
        out_shape=jax.ShapeDtypeStruct((B, C, 1), jnp.float32),
        grid_spec=pltpu.PrefetchScalarGridSpec(
            num_scalar_prefetch=0,
            grid=(B, n_l_red),
            in_specs=[pl.BlockSpec((1, C, l_tile), lambda b, l: (b, 0, l))],
            out_specs=pl.BlockSpec((1, C, 1), lambda b, l: (b, 0, 0)),
        ),
        compiler_params=pltpu.CompilerParams(
            dimension_semantics=("parallel", "arbitrary")),
        cost_estimate=pl.CostEstimate(
            flops=B * C * n_l_red * l_tile,
            transcendentals=0,
            bytes_accessed=B * C * n_l_red * l_tile * itemsize + B * C * 4),
    )(data)

    # ---- Tiny MLP gate in plain JAX (keeps the hot kernels pure streams) ---
    s = sums[:, :, 0] / jnp.float32(eff_len)                              # (B, C)
    h1 = jnp.maximum(jnp.dot(s, w1.T, preferred_element_type=jnp.float32) + b1, 0.0)
    gate = jax.nn.sigmoid(jnp.dot(h1, w2.T, preferred_element_type=jnp.float32) + b2)
    gate = gate.astype(data.dtype)[:, :, None]                            # (B, C, 1)

    # ---- Pass B: tiled, pipelined gate * data ------------------------------
    out = pl.pallas_call(
        _gate_mul_kernel,
        out_shape=jax.ShapeDtypeStruct((B, C, L), data.dtype),
        grid_spec=pltpu.PrefetchScalarGridSpec(
            num_scalar_prefetch=0,
            grid=(B, n_l_all),
            in_specs=[pl.BlockSpec((1, C, 1), lambda b, l: (b, 0, 0)),
                      pl.BlockSpec((1, C, l_tile), lambda b, l: (b, 0, l))],
            out_specs=pl.BlockSpec((1, C, l_tile), lambda b, l: (b, 0, l)),
        ),
        compiler_params=pltpu.CompilerParams(
            dimension_semantics=("parallel", "parallel")),
        cost_estimate=pl.CostEstimate(
            flops=B * C * L,
            transcendentals=0,
            bytes_accessed=2 * B * C * L * itemsize + B * C * itemsize),
    )(gate, data)
    return out


def _reference(data, w1, b1, w2, b2, *, out_channels, mean_pool=True):
    # pure-JAX reference mirroring the PyTorch forward
    B, C, L = data.shape
    K = out_channels
    n_win = L // K
    pool = jnp.mean(data[:, :, : n_win * K].reshape(B, C, n_win, K), axis=-1)
    pool = jnp.mean(pool, axis=-1) if mean_pool else pool[:, :, 0]
    h1 = jnp.maximum(pool @ w1.T + b1, 0.0)
    h2 = jax.nn.sigmoid(h1 @ w2.T + b2)
    return h2[:, :, None] * data


if __name__ == "__main__":
    # in_channels == out_channels so the final broadcast-multiply is valid,
    # exactly as the PyTorch module requires.  L=520 exercises the AvgPool1d
    # trim (520 -> 512) and a partial last L tile when l_tile=128.
    B, C, L = 2, 32, 520
    out_channels = C
    hidden = out_channels // 8   # = 4

    key = jax.random.PRNGKey(0)
    k_data, k_w1, k_b1, k_w2, k_b2 = jax.random.split(key, 5)

    data = jax.random.normal(k_data, (B, C, L), dtype=jnp.float32)
    # deterministic synthetic parameters (nn.Linear shapes: (out, in) / (out,))
    w1 = jax.random.normal(k_w1, (hidden, C), dtype=jnp.float32) * 0.1
    b1 = jax.random.normal(k_b1, (hidden,), dtype=jnp.float32) * 0.1
    w2 = jax.random.normal(k_w2, (out_channels, hidden), dtype=jnp.float32) * 0.1
    b2 = jax.random.normal(k_b2, (out_channels,), dtype=jnp.float32) * 0.1

    ok = True
    for mean_pool in (True, False):
        ref = _reference(data, w1, b1, w2, b2,
                         out_channels=out_channels, mean_pool=mean_pool)

        # forced 128-lane tiles -> multi-tile grid over L
        out = global_context(data, w1, b1, w2, b2,
                             out_channels=out_channels, mean_pool=mean_pool,
                             l_tile=128)
        out = jax.block_until_ready(out)
        ok &= out.shape == data.shape
        ok &= bool(jnp.allclose(out, ref, atol=1e-5, rtol=1e-5))

        # default auto-sized tile (single tile at this small L)
        out2 = jax.block_until_ready(
            global_context(data, w1, b1, w2, b2,
                           out_channels=out_channels, mean_pool=mean_pool))
        ok &= bool(jnp.allclose(out2, ref, atol=1e-5, rtol=1e-5))

    assert ok
    print("KERNEL_OK")
</pallas_src>

<mosaic_0001>
module attributes {stable_mosaic.version = 11 : i64} {
  func.func @_pool_sum_kernel(%arg0: i32, %arg1: i32, %arg2: memref<1x32x128xf32, #tpu.memory_space<vmem>>, %arg3: memref<1x32x1xf32, #tpu.memory_space<vmem>>) attributes {dimension_semantics = [#tpu.dimension_semantics<parallel>, #tpu.dimension_semantics<arbitrary>], iteration_bounds = array<i64: 2, 4>, scalar_prefetch = 0 : i64, scratch_operands = 0 : i64, tpu.core_type = #tpu.core_type<tc>, window_params = [{transform_indices = @transform_0, window_bounds = array<i64: 1, 32, 128>}, {transform_indices = @transform_1, window_bounds = array<i64: 1, 32, 1>}]} {
    %c0_i32 = arith.constant 0 : i32
    %0 = arith.cmpi eq, %arg1, %c0_i32 : i32
    %1 = arith.extui %0 : i1 to i32
    %c0_i32_0 = arith.constant 0 : i32
    %2 = arith.cmpi ne, %1, %c0_i32_0 : i32
    scf.if %2 {
      %cst_10 = arith.constant 0.000000e+00 : f32
      %17 = vector.broadcast %cst_10 : f32 to vector<1x32x1xf32>
      %c0_11 = arith.constant 0 : index
      %c0_12 = arith.constant 0 : index
      %c0_13 = arith.constant 0 : index
      %18 = vector.load %arg3[%c0_11, %c0_12, %c0_13] : memref<1x32x1xf32, #tpu.memory_space<vmem>>, vector<1x32x1xf32>
      tpu.vector_store %arg3[%c0_11, %c0_12, %c0_13], %17 {strides = array<i32>} : memref<1x32x1xf32, #tpu.memory_space<vmem>>, vector<1x32x1xf32>,
    } else {
    }
    %c0 = arith.constant 0 : index
    %c0_1 = arith.constant 0 : index
    %c0_2 = arith.constant 0 : index
    %3 = vector.load %arg2[%c0, %c0_1, %c0_2] : memref<1x32x128xf32, #tpu.memory_space<vmem>>, vector<1x32x128xf32>
    %c128_i32 = arith.constant 128 : i32
    %4 = arith.muli %arg1, %c128_i32 : i32
    %5 = tpu.iota {dimensions = array<i32: 2>} : vector<1x32x128xi32>
    %6 = vector.broadcast %4 : i32 to vector<1x32x128xi32>
    %7 = arith.addi %6, %5 : vector<1x32x128xi32>
    %c512_i32 = arith.constant 512 : i32
    %8 = vector.broadcast %c512_i32 : i32 to vector<1x32x128xi32>
    %9 = arith.cmpi slt, %7, %8 : vector<1x32x128xi32>
    %cst = arith.constant 0.000000e+00 : f32
    %10 = vector.broadcast %cst : f32 to vector<1x32x128xf32>
    %11 = arith.select %9, %3, %10 : vector<1x32x128xi1>, vector<1x32x128xf32>
    %c0_3 = arith.constant 0 : index
    %c0_4 = arith.constant 0 : index
    %c0_5 = arith.constant 0 : index
    %12 = vector.load %arg3[%c0_3, %c0_4, %c0_5] : memref<1x32x1xf32, #tpu.memory_space<vmem>>, vector<1x32x1xf32>
    %cst_6 = arith.constant dense<0.000000e+00> : vector<1x32xf32>
    %13 = vector.multi_reduction <add>, %11, %cst_6 [2] : vector<1x32x128xf32> to vector<1x32xf32>
    %14 = vector.shape_cast %13 : vector<1x32xf32> to vector<1x32x1xf32>
    %15 = arith.addf %12, %14 : vector<1x32x1xf32>
    %c0_7 = arith.constant 0 : index
    %c0_8 = arith.constant 0 : index
    %c0_9 = arith.constant 0 : index
    %16 = vector.load %arg3[%c0_7, %c0_8, %c0_9] : memref<1x32x1xf32, #tpu.memory_space<vmem>>, vector<1x32x1xf32>
    tpu.vector_store %arg3[%c0_7, %c0_8, %c0_9], %15 {strides = array<i32>} : memref<1x32x1xf32, #tpu.memory_space<vmem>>, vector<1x32x1xf32>,
    return
  }
  func.func @transform_0(%arg0: i32, %arg1: i32) -> (i32, i32, i32) {
    %c0_i32 = arith.constant 0 : i32
    %c0_i32_0 = arith.constant 0 : i32
    return %arg0, %c0_i32, %arg1 : i32, i32, i32
  }
  func.func @transform_1(%arg0: i32, %arg1: i32) -> (i32, i32, i32) {
    %c0_i32 = arith.constant 0 : i32
    %c0_i32_0 = arith.constant 0 : i32
    %c0_i32_1 = arith.constant 0 : i32
    return %arg0, %c0_i32, %c0_i32_0 : i32, i32, i32
  }
}

module attributes {stable_mosaic.version = 11 : i64} {
  func.func @_gate_mul_kernel(%arg0: i32, %arg1: i32, %arg2: memref<1x32x1xf32, #tpu.memory_space<vmem>>, %arg3: memref<1x32x128xf32, #tpu.memory_space<vmem>>, %arg4: memref<1x32x128xf32, #tpu.memory_space<vmem>>) attributes {dimension_semantics = [#tpu.dimension_semantics<parallel>, #tpu.dimension_semantics<parallel>], iteration_bounds = array<i64: 2, 5>, scalar_prefetch = 0 : i64, scratch_operands = 0 : i64, tpu.core_type = #tpu.core_type<tc>, window_params = [{transform_indices = @transform_0, window_bounds = array<i64: 1, 32, 1>}, {transform_indices = @transform_1, window_bounds = array<i64: 1, 32, 128>}, {transform_indices = @transform_2, window_bounds = array<i64: 1, 32, 128>}]} {
    %c0 = arith.constant 0 : index
    %c0_0 = arith.constant 0 : index
    %c0_1 = arith.constant 0 : index
    %0 = vector.load %arg2[%c0, %c0_0, %c0_1] : memref<1x32x1xf32, #tpu.memory_space<vmem>>, vector<1x32x1xf32>
    %c0_2 = arith.constant 0 : index
    %c0_3 = arith.constant 0 : index
    %c0_4 = arith.constant 0 : index
    %1 = vector.load %arg3[%c0_2, %c0_3, %c0_4] : memref<1x32x128xf32, #tpu.memory_space<vmem>>, vector<1x32x128xf32>
    %2 = vector.broadcast %0 : vector<1x32x1xf32> to vector<1x32x128xf32>
    %3 = arith.mulf %2, %1 : vector<1x32x128xf32>
    %c0_5 = arith.constant 0 : index
    %c0_6 = arith.constant 0 : index
    %c0_7 = arith.constant 0 : index
    %4 = vector.load %arg4[%c0_5, %c0_6, %c0_7] : memref<1x32x128xf32, #tpu.memory_space<vmem>>, vector<1x32x128xf32>
    tpu.vector_store %arg4[%c0_5, %c0_6, %c0_7], %3 {strides = array<i32>} : memref<1x32x128xf32, #tpu.memory_space<vmem>>, vector<1x32x128xf32>,
    return
  }
  func.func @transform_0(%arg0: i32, %arg1: i32) -> (i32, i32, i32) {
    %c0_i32 = arith.constant 0 : i32
    %c0_i32_0 = arith.constant 0 : i32
    %c0_i32_1 = arith.constant 0 : i32
    return %arg0, %c0_i32, %c0_i32_0 : i32, i32, i32
  }
  func.func @transform_1(%arg0: i32, %arg1: i32) -> (i32, i32, i32) {
    %c0_i32 = arith.constant 0 : i32
    %c0_i32_0 = arith.constant 0 : i32
    return %arg0, %c0_i32, %arg1 : i32, i32, i32
  }
  func.func @transform_2(%arg0: i32, %arg1: i32) -> (i32, i32, i32) {
    %c0_i32 = arith.constant 0 : i32
    %c0_i32_0 = arith.constant 0 : i32
    return %arg0, %c0_i32, %arg1 : i32, i32, i32
  }
}

</mosaic_0001>

<llo_original>
// kernel: global_context.2
$region0: #{global_context.2}
  #allocation0 [shape = 'u32[]', space=smem, size = 0x4, offset = 0x4, fixed_abs, tag = 'smem constant byte address 0x4 - core index']
  #allocation1 [shape = 'u32[144,128]{1,0:T(1,128)}', space=vmem, size = 0x12000, scoped, tag = 'internal scratch']
  %s0 = inlined_call_operand.hbm [shape: f32[2,32,520], index: 0, kind: input, shape index: {}]
  %s1 = inlined_call_operand.vmem [shape: f32[2,32,1], index: 1, kind: output, shape index: {}]
  %s2 = sld [smem:[#allocation0]]
  $region45: #{global_context.2} parent=0
    _
  %s4 = ssub.s32 1, %s2
  %s5 = scalar_select 0, %s4, %s2
  $region1: #{global_context.2} parent=0
    #allocation2 [shape = 'u8[32768]{0}', space=vmem, size = 0x8000, scoped, tag = 'input window, operand 0']
    #allocation3 [shape = 's32[2]{0}', space=sflag, size = 0x8, scoped, tag = 'scoped memory for global_context.2']
    %6 = vsyncpa [#allocation3], 0
    %s7 = scalar_lea.sflag [#allocation3], 1
    %8 = vsyncpa %s7, 0
    loop: start=0, step=1, limit=10
    $region2: #{global_context.2} parent=1 // loop_pre_header
      _
    $region3: #{global_context.2} parent=1 // loop_header
      %s10 = sphi 0, %s14
      %p11 = scmp.ge.s32.totalorder %s10, 10
      %s17 = sphi 0, %s29
      %s18 = sphi 0, %s25
      %s19 = sphi 0, %s17
      %s20 = sphi 0, %s18
      %s21 = sphi 0, %s19
      %s22 = sphi 0, %s20
      %s34 = sphi 0, %s36
      %s37 = sphi 0, %s34
      %s38 = sphi 0, %s37
      %s54 = sphi 0, %s38
      %s60 = sphi 0, %s62
      %s63 = sphi 0, %s60
      %s64 = sphi 0, %s63
      %s80 = sphi 0, %s64
    $region4: #{global_context.2} parent=1 // loop_header_branch
      %13 = sbr.rel (%p11) target = $region8
    $region5: #{global_context.2} parent=1 // loop_body
      %s15 = ssub.s32 %s10, 1
      %s16 = ssub.s32 %s10, 2
      %s23 = sadd.s32 1, %s18
      %p24 = scmp.ge.s32.totalorder %s23, 4
      %s25 = scalar_select %p24, 0, %s23
      %s26 = sadd.s32 1, %s17
      %s27 = scalar_select %p24, %s26, %s17
      %p28 = scmp.ge.s32.totalorder %s27, 2
      %s29 = scalar_select %p28, 0, %s27
      %s30 = ssub.s32 %s17, %s29
      %s31 = ssub.s32 %s18, %s25
      %s32 = sor.u32 %s30, %s31
      %p33 = scmp.eq.s32.totalorder %s32, 0
      %s35 = sadd.s32 %s34, 1
      %s36 = scalar_select %p33, %s34, %s35
      %p39 = pneg %p33
      %p40 = scmp.eq.s32.totalorder %s10, 7
      %p41 = por %p39, %p40
      %p42 = scmp.ne.s32.totalorder %s34, %s37
      %p43 = scmp.eq.s32.totalorder %s10, 0
      %p44 = por %p42, %p43
      %p45 = scmp.ne.s32.totalorder %s34, %s37
      %p46 = scmp.eq.s32.totalorder %s15, 7
      %p47 = por %p45, %p46
      %p48 = scmp.ne.s32.totalorder %s37, %s38
      %p49 = scmp.eq.s32.totalorder %s15, 0
      %p50 = por %p48, %p49
      %p51 = scmp.ne.s32.totalorder %s37, %s38
      %p52 = scmp.eq.s32.totalorder %s16, 7
      %p53 = por %p51, %p52
      %p55 = scmp.ne.s32.totalorder %s38, %s54
      %p56 = scmp.eq.s32.totalorder %s16, 0
      %p57 = por %p55, %p56
      %s58 = ssub.s32 %s17, %s29
      %p59 = scmp.eq.s32.totalorder %s58, 0
      %s61 = sadd.s32 %s60, 1
      %s62 = scalar_select %p59, %s60, %s61
      %p65 = pneg %p59
      %p66 = scmp.eq.s32.totalorder %s10, 7
      %p67 = por %p65, %p66
      %p68 = scmp.ne.s32.totalorder %s60, %s63
      %p69 = scmp.eq.s32.totalorder %s10, 0
      %p70 = por %p68, %p69
      %p71 = scmp.ne.s32.totalorder %s60, %s63
      %p72 = scmp.eq.s32.totalorder %s15, 7
      %p73 = por %p71, %p72
      %p74 = scmp.ne.s32.totalorder %s63, %s64
      %p75 = scmp.eq.s32.totalorder %s15, 0
      %p76 = por %p74, %p75
      %p77 = scmp.ne.s32.totalorder %s63, %s64
      %p78 = scmp.eq.s32.totalorder %s16, 7
      %p79 = por %p77, %p78
      %p81 = scmp.ne.s32.totalorder %s64, %s80
      %p82 = scmp.eq.s32.totalorder %s16, 0
      %p83 = por %p81, %p82
      %p84 = scmp.le.s32.totalorder 1, %s10
      %p85 = scmp.lt.s32.totalorder %s10, 9
      %p86 = pnand %p84, %p85
      %p87 = pneg %p86
      // Predicated region
      $region9: #{global_context.2} parent=5 // pred_check
        _
      $region10: #{global_context.2} parent=5 // pred_check_branch
        %89 = sbr.rel (%p86) target = $region12
      $region11: #{global_context.2} parent=5 // pred_region
        %s90 = ssub.s32 %s10, 1
      $region12: #{global_context.2} parent=5 // pred_fallthru
        _
      %p91 = scmp.lt.s32.totalorder %s10, 8
      // Predicated region
      $region13: #{global_context.2} parent=5 // pred_check
        %p92 = pneg %p91
      $region14: #{global_context.2} parent=5 // pred_check_branch
        %94 = sbr.rel (%p92) target = $region16
      $region15: #{global_context.2} parent=5 // pred_region
        // Predicated region
        $region17: #{global_context.2} parent=15 // pred_check
          %p95 = pneg %p44
        $region18: #{global_context.2} parent=15 // pred_check_branch
          %97 = sbr.rel (%p95) target = $region20
        $region19: #{global_context.2} parent=15 // pred_region
          %s98 = sand.u32 %s34, 1
          %s99 = scalar_lea.sflag [#allocation3], %s98
          %s100 = sand.u32 %s34, 1
          %s101 = smul.addr %s100, 32
          %s102 = scalar_lea.vmem [#allocation2], %s101
          %s104 = ssub.s32 512, 512
          %105 = vsyncadd %s99, %s104
          %s106 = smul.addr %s17, 20
          %s107 = sadd.s32 %s18, %s106
          %s108 = smul.addr %s107, 128
          %s109 = scalar_lea.hbm %s0, %s108
          %s110 = sshll.u32 %s102, 4
          %s111 = int_to_ptr.vmem [resolvable:$true] %s110
          %116 = dma.hbm_to_vmem [thread:$0]  %s109, 512, %s111, %s99, 640, 128, 8
        $region20: #{global_context.2} parent=15 // pred_fallthru
          _
      $region16: #{global_context.2} parent=5 // pred_fallthru
        _
      %p117 = scmp.le.s32.totalorder 1, %s10
      %p118 = scmp.lt.s32.totalorder %s10, 9
      %p119 = pnand %p117, %p118
      %p120 = pneg %p119
      // Predicated region
      $region21: #{global_context.2} parent=5 // pred_check
        _
      $region22: #{global_context.2} parent=5 // pred_check_branch
        %122 = sbr.rel (%p119) target = $region24
      $region23: #{global_context.2} parent=5 // pred_region
        %s123 = ssub.s32 %s10, 1
        %s124 = sand.u32 %s37, 1
        %s125 = scalar_lea.sflag [#allocation3], %s124
        %s126 = sand.u32 %s37, 1
        %s127 = smul.addr %s126, 32
        %s128 = scalar_lea.vmem [#allocation2], %s127
        // Predicated region
        $region25: #{global_context.2} parent=23 // pred_check
          %p129 = pneg %p50
        $region26: #{global_context.2} parent=23 // pred_check_branch
          %131 = sbr.rel (%p129) target = $region28
        $region27: #{global_context.2} parent=23 // pred_region
          %132 = dma.done %s125, 512
        $region28: #{global_context.2} parent=23 // pred_fallthru
          _
        %s133 = sand.u32 %s37, 1
        %s134 = scalar_lea.sflag [#allocation3], %s133
        %s135 = sand.u32 %s37, 1
        %s136 = smul.addr %s135, 32
        %s137 = scalar_lea.vmem [#allocation2], %s136
        %p138 = pneg %p50
        %p139 = pneg %p47
        %p140 = pneg %p76
        %p141 = pneg %p73
        %p142 = scmp.lt.s32.totalorder %s19, 1
        %s143 = scalar_select %p142, %s19, 1
        %s144 = smul.addr %s143, 4
        %s145 = smul.addr %s144, 8
        %s146 = scalar_lea.vmem %s1, %s145
        %p147 = scmp.lt.s32.totalorder %s19, 1
        %s148 = scalar_select %p147, %s19, 1
        %s149 = smul.addr %s148, 4
        %s150 = smul.addr %s149, 8
        %s151 = scalar_lea.vmem %s1, %s150
        %p152 = scmp.eq.s32.totalorder %s20, 0
        // Predicated region
        $region29: #{global_context.2} parent=23 // pred_check
          %p153 = pneg %p152
        $region30: #{global_context.2} parent=23 // pred_check_branch
          %155 = sbr.rel (%p153) target = $region32
        $region31: #{global_context.2} parent=23 // pred_region
          %vm156 = vcmask 7168
          %157 = vst.msk [vmem:[%s151] sm:$0xff] %vm156, 0.0
          %158 = vst.msk [vmem:[%s151 + $0x8] sm:$0xff] %vm156, 0.0
          %159 = vst.msk [vmem:[%s151 + $0x10] sm:$0xff] %vm156, 0.0
          %160 = vst.msk [vmem:[%s151 + $0x18] sm:$0xff] %vm156, 0.0
        $region32: #{global_context.2} parent=23 // pred_fallthru
          _
        %v161 = vld [vmem:[%s128] sm:$0xff]
        %v162 = vld [vmem:[%s128 + $0x8] sm:$0xff]
        %v163 = vld [vmem:[%s128 + $0x10] sm:$0xff]
        %v164 = vld [vmem:[%s128 + $0x18] sm:$0xff]
        %s165 = smul.u32 %s20, 128
        %v166 = vlaneseq
        %v167 = vand.u32 %v166, 127
        %v168 = vstv %s165
        %v169 = vadd.s32 %v168, %v167
        %vm170 = vcmp.lt.s32.totalorder %v169, 512
        %v171 = vsel %vm170, %v161, 0.0
        %v172 = vsel %vm170, %v162, 0.0
        %v173 = vsel %vm170, %v163, 0.0
        %v174 = vsel %vm170, %v164, 0.0
        %v175 = vld [vmem:[%s151] sm:$0xff]
        %v176 = vld [vmem:[%s151 + $0x8] sm:$0xff]
        %v177 = vld [vmem:[%s151 + $0x10] sm:$0xff]
        %v178 = vld [vmem:[%s151 + $0x18] sm:$0xff]
        %179 = vadd.xlane.f32.xlu0 %v171
        %v180 = vpop.xlane.xlu0 %179
        %181 = vadd.xlane.f32.xlu0 %v172
        %v182 = vpop.xlane.xlu0 %181
        %183 = vadd.xlane.f32.xlu0 %v173
        %v184 = vpop.xlane.xlu0 %183
        %185 = vadd.xlane.f32.xlu0 %v174
        %v186 = vpop.xlane.xlu0 %185
        %v187 = vadd.f32 %v175, %v180
        %v188 = vadd.f32 %v176, %v182
        %v189 = vadd.f32 %v177, %v184
        %v190 = vadd.f32 %v178, %v186
        %vm191 = vcmask 7168
        %192 = vst.msk [vmem:[%s151] sm:$0xff] %vm191, %v187
        %193 = vst.msk [vmem:[%s151 + $0x8] sm:$0xff] %vm191, %v188
        %194 = vst.msk [vmem:[%s151 + $0x10] sm:$0xff] %vm191, %v189
        %195 = vst.msk [vmem:[%s151 + $0x18] sm:$0xff] %vm191, %v190
        %p196 = scmp.lt.s32.totalorder %s19, 1
        %s197 = scalar_select %p196, %s19, 1
        %s198 = smul.addr %s197, 4
        %s199 = smul.addr %s198, 8
        %s200 = scalar_lea.vmem %s1, %s199
        // Predicated region
        $region33: #{global_context.2} parent=23 // pred_check
          %p201 = pneg %p73
        $region34: #{global_context.2} parent=23 // pred_check_branch
          %203 = sbr.rel (%p201) target = $region36
        $region35: #{global_context.2} parent=23 // pred_region
          _
        $region36: #{global_context.2} parent=23 // pred_fallthru
          _
      $region24: #{global_context.2} parent=5 // pred_fallthru
        _
      %p204 = scmp.le.s32.totalorder 2, %s10
      // Predicated region
      $region37: #{global_context.2} parent=5 // pred_check
        %p205 = pneg %p204
      $region38: #{global_context.2} parent=5 // pred_check_branch
        %207 = sbr.rel (%p205) target = $region40
      $region39: #{global_context.2} parent=5 // pred_region
        %s208 = ssub.s32 %s10, 2
        // Predicated region
        $region41: #{global_context.2} parent=39 // pred_check
          %p209 = pneg %p79
        $region42: #{global_context.2} parent=39 // pred_check_branch
          %211 = sbr.rel (%p209) target = $region44
        $region43: #{global_context.2} parent=39 // pred_region
          %p212 = scmp.lt.s32.totalorder %s21, 1
          %s213 = scalar_select %p212, %s21, 1
          %s214 = smul.addr %s213, 4
          %s215 = smul.addr %s214, 8
          %s216 = scalar_lea.vmem %s1, %s215
        $region44: #{global_context.2} parent=39 // pred_fallthru
          _
      $region40: #{global_context.2} parent=5 // pred_fallthru
        _
    $region6: #{global_context.2} parent=1 // loop_footer
      %s14 = sadd.s32 1, %s10
    $region7: #{global_context.2} parent=1 // loop_footer_branch
      %9 = sbr.rel target = $region3
    $region8: #{global_context.2} parent=1 // loop_exit
      _
    %217 = vsyncpa [#allocation3], 1
    %s218 = scalar_lea.sflag [#allocation3], 1
    %219 = vsyncpa %s218, 1

// kernel: global_context.3
$region0: #{global_context.3}
  #allocation0 [shape = 'u32[]', space=smem, size = 0x4, offset = 0x4, fixed_abs, tag = 'smem constant byte address 0x4 - core index']
  #allocation1 [shape = 'u32[144,128]{1,0:T(1,128)}', space=vmem, size = 0x12000, scoped, tag = 'internal scratch']
  %s0 = inlined_call_operand.vmem [shape: f32[2,32,1], index: 0, kind: input, shape index: {}]
  %s1 = inlined_call_operand.vmem [shape: f32[2,32,520], index: 1, kind: input, shape index: {}]
  %s2 = inlined_call_operand.hbm [shape: f32[2,32,520], index: 2, kind: output, shape index: {}]
  %s3 = sld [smem:[#allocation0]]
  $region79: #{global_context.3} parent=0
    _
  %s5 = ssub.s32 1, %s3
  %s6 = scalar_select 0, %s5, %s3
  $region1: #{global_context.3} parent=0
    #allocation2 [shape = 'u8[32768]{0}', space=vmem, size = 0x8000, scoped, tag = 'input window, operand 1']
    #allocation3 [shape = 'u8[32768]{0}', space=vmem, size = 0x8000, scoped, tag = 'output window, operand 0']
    #allocation4 [shape = 's32[2]{0}', space=sflag, size = 0x8, scoped, tag = 'scoped memory for global_context.3']
    %7 = vsyncpa [#allocation4], 0
    %s8 = scalar_lea.sflag [#allocation4], 1
    %9 = vsyncpa %s8, 0
    loop: start=0, step=1, limit=12
    $region2: #{global_context.3} parent=1 // loop_pre_header
      _
    $region3: #{global_context.3} parent=1 // loop_header
      %s11 = sphi 0, %s15
      %p12 = scmp.ge.s32.totalorder %s11, 12
      %s18 = sphi 0, %s30
      %s19 = sphi 0, %s26
      %s20 = sphi 0, %s18
      %s21 = sphi 0, %s19
      %s22 = sphi 0, %s20
      %s23 = sphi 0, %s21
      %s33 = sphi 0, %s35
      %s36 = sphi 0, %s33
      %s37 = sphi 0, %s36
      %s53 = sphi 0, %s37
      %s61 = sphi 0, %s63
      %s64 = sphi 0, %s61
      %s65 = sphi 0, %s64
      %s81 = sphi 0, %s65
      %s89 = sphi 0, %s91
      %s92 = sphi 0, %s89
      %s93 = sphi 0, %s92
      %s109 = sphi 0, %s93
    $region4: #{global_context.3} parent=1 // loop_header_branch
      %14 = sbr.rel (%p12) target = $region8
    $region5: #{global_context.3} parent=1 // loop_body
      %s16 = ssub.s32 %s11, 1
      %s17 = ssub.s32 %s11, 2
      %s24 = sadd.s32 1, %s19
      %p25 = scmp.ge.s32.totalorder %s24, 5
      %s26 = scalar_select %p25, 0, %s24
      %s27 = sadd.s32 1, %s18
      %s28 = scalar_select %p25, %s27, %s18
      %p29 = scmp.ge.s32.totalorder %s28, 2
      %s30 = scalar_select %p29, 0, %s28
      %s31 = ssub.s32 %s18, %s30
      %p32 = scmp.eq.s32.totalorder %s31, 0
      %s34 = sadd.s32 %s33, 1
      %s35 = scalar_select %p32, %s33, %s34
      %p38 = pneg %p32
      %p39 = scmp.eq.s32.totalorder %s11, 9
      %p40 = por %p38, %p39
      %p41 = scmp.ne.s32.totalorder %s33, %s36
      %p42 = scmp.eq.s32.totalorder %s11, 0
      %p43 = por %p41, %p42
      %p44 = scmp.ne.s32.totalorder %s33, %s36
      %p45 = scmp.eq.s32.totalorder %s16, 9
      %p46 = por %p44, %p45
      %p47 = scmp.ne.s32.totalorder %s36, %s37
      %p48 = scmp.eq.s32.totalorder %s16, 0
      %p49 = por %p47, %p48
      %p50 = scmp.ne.s32.totalorder %s36, %s37
      %p51 = scmp.eq.s32.totalorder %s17, 9
      %p52 = por %p50, %p51
      %p54 = scmp.ne.s32.totalorder %s37, %s53
      %p55 = scmp.eq.s32.totalorder %s17, 0
      %p56 = por %p54, %p55
      %s57 = ssub.s32 %s18, %s30
      %s58 = ssub.s32 %s19, %s26
      %s59 = sor.u32 %s57, %s58
      %p60 = scmp.eq.s32.totalorder %s59, 0
      %s62 = sadd.s32 %s61, 1
      %s63 = scalar_select %p60, %s61, %s62
      %p66 = pneg %p60
      %p67 = scmp.eq.s32.totalorder %s11, 9
      %p68 = por %p66, %p67
      %p69 = scmp.ne.s32.totalorder %s61, %s64
      %p70 = scmp.eq.s32.totalorder %s11, 0
      %p71 = por %p69, %p70
      %p72 = scmp.ne.s32.totalorder %s61, %s64
      %p73 = scmp.eq.s32.totalorder %s16, 9
      %p74 = por %p72, %p73
      %p75 = scmp.ne.s32.totalorder %s64, %s65
      %p76 = scmp.eq.s32.totalorder %s16, 0
      %p77 = por %p75, %p76
      %p78 = scmp.ne.s32.totalorder %s64, %s65
      %p79 = scmp.eq.s32.totalorder %s17, 9
      %p80 = por %p78, %p79
      %p82 = scmp.ne.s32.totalorder %s65, %s81
      %p83 = scmp.eq.s32.totalorder %s17, 0
      %p84 = por %p82, %p83
      %s85 = ssub.s32 %s18, %s30
      %s86 = ssub.s32 %s19, %s26
      %s87 = sor.u32 %s85, %s86
      %p88 = scmp.eq.s32.totalorder %s87, 0
      %s90 = sadd.s32 %s89, 1
      %s91 = scalar_select %p88, %s89, %s90
      %p94 = pneg %p88
      %p95 = scmp.eq.s32.totalorder %s11, 9
      %p96 = por %p94, %p95
      %p97 = scmp.ne.s32.totalorder %s89, %s92
      %p98 = scmp.eq.s32.totalorder %s11, 0
      %p99 = por %p97, %p98
      %p100 = scmp.ne.s32.totalorder %s89, %s92
      %p101 = scmp.eq.s32.totalorder %s16, 9
      %p102 = por %p100, %p101
      %p103 = scmp.ne.s32.totalorder %s92, %s93
      %p104 = scmp.eq.s32.totalorder %s16, 0
      %p105 = por %p103, %p104
      %p106 = scmp.ne.s32.totalorder %s92, %s93
      %p107 = scmp.eq.s32.totalorder %s17, 9
      %p108 = por %p106, %p107
      %p110 = scmp.ne.s32.totalorder %s93, %s109
      %p111 = scmp.eq.s32.totalorder %s17, 0
      %p112 = por %p110, %p111
      %p113 = scmp.le.s32.totalorder 1, %s11
      %p114 = scmp.lt.s32.totalorder %s11, 11
      %p115 = pnand %p113, %p114
      %p116 = pneg %p115
      // Predicated region
      $region9: #{global_context.3} parent=5 // pred_check
        _
      $region10: #{global_context.3} parent=5 // pred_check_branch
        %118 = sbr.rel (%p115) target = $region12
      $region11: #{global_context.3} parent=5 // pred_region
        %s119 = ssub.s32 %s11, 1
      $region12: #{global_context.3} parent=5 // pred_fallthru
        _
      %p120 = scmp.lt.s32.totalorder %s11, 10
      // Predicated region
      $region13: #{global_context.3} parent=5 // pred_check
        %p121 = pneg %p120
      $region14: #{global_context.3} parent=5 // pred_check_branch
        %123 = sbr.rel (%p121) target = $region16
      $region15: #{global_context.3} parent=5 // pred_region
        // Predicated region
        $region17: #{global_context.3} parent=15 // pred_check
          %p124 = pneg %p43
        $region18: #{global_context.3} parent=15 // pred_check_branch
          %126 = sbr.rel (%p124) target = $region20
        $region19: #{global_context.3} parent=15 // pred_region
          %p127 = scmp.lt.s32.totalorder %s18, 1
          %s128 = scalar_select %p127, %s18, 1
          %s129 = smul.addr %s128, 4
          %s130 = smul.addr %s129, 8
          %s131 = scalar_lea.vmem %s0, %s130
        $region20: #{global_context.3} parent=15 // pred_fallthru
          _
        // Predicated region
        $region21: #{global_context.3} parent=15 // pred_check
          %p132 = pneg %p71
        $region22: #{global_context.3} parent=15 // pred_check_branch
          %134 = sbr.rel (%p132) target = $region24
        $region23: #{global_context.3} parent=15 // pred_region
          %s135 = sand.u32 %s61, 1
          %s136 = sand.u32 %s61, 1
          %s137 = smul.addr %s136, 32
          %s138 = scalar_lea.vmem [#allocation2], %s137
          %s139 = smul.addr %s18, 20
          %s140 = sadd.s32 %s19, %s139
          %s141 = smul.addr %s140, 8
          %s142 = scalar_lea.vmem %s1, %s141
          // Predicated region
          $region25: #{global_context.3} parent=23 // pred_check
            _
          $region26: #{global_context.3} parent=23 // pred_check_branch
            %144 = sbr.rel (0) target = $region28
          $region27: #{global_context.3} parent=23 // pred_region
            // Predicated region
            $region29: #{global_context.3} parent=27 // pred_check
              _
            $region30: #{global_context.3} parent=27 // pred_check_branch
              %146 = sbr.rel (0) target = $region32
            $region31: #{global_context.3} parent=27 // pred_region
              // Predicated region
              $region44: #{global_context.3} parent=31 // pred_check
                _
              $region45: #{global_context.3} parent=31 // pred_check_branch
                %168 = sbr.rel (0) target = $region47
              $region46: #{global_context.3} parent=31 // pred_region
                loop: start=0, step=1, limit=1
                $region48: #{global_context.3} parent=46 // loop_pre_header
                  _
                $region49: #{global_context.3} parent=46 // loop_header
                  %s170 = sphi 0, %s174
                  %p171 = scmp.ge.s32.totalorder %s170, 1
                  %s175 = sphi %s142, %s142
                  %s176 = sphi %s138, %s138
                $region50: #{global_context.3} parent=46 // loop_header_branch
                  %173 = sbr.rel (%p171) target = $region54
                $region51: #{global_context.3} parent=46 // loop_body
                  %v177 = vld [vmem:[%s175] sm:$0xff]
                  %178 = vst [vmem:[%s176] sm:$0xff] %v177
                  %v179 = vld [vmem:[%s175 + $0x28] sm:$0xff]
                  %180 = vst [vmem:[%s176 + $0x8] sm:$0xff] %v179
                  %v181 = vld [vmem:[%s175 + $0x50] sm:$0xff]
                  %182 = vst [vmem:[%s176 + $0x10] sm:$0xff] %v181
                  %v183 = vld [vmem:[%s175 + $0x78] sm:$0xff]
                  %184 = vst [vmem:[%s176 + $0x18] sm:$0xff] %v183
                $region52: #{global_context.3} parent=46 // loop_footer
                  %s174 = sadd.s32 1, %s170
                $region53: #{global_context.3} parent=46 // loop_footer_branch
                  %169 = sbr.rel target = $region49
                $region54: #{global_context.3} parent=46 // loop_exit
                  _
              $region47: #{global_context.3} parent=31 // pred_fallthru
                _
              // Predicated region
              $region55: #{global_context.3} parent=31 // pred_check
                _
              $region56: #{global_context.3} parent=31 // pred_check_branch
                %186 = sbr.rel target = $region58
              $region57: #{global_context.3} parent=31 // pred_region
                _
              $region58: #{global_context.3} parent=31 // pred_fallthru
                _
            $region32: #{global_context.3} parent=27 // pred_fallthru
              _
            // Predicated region
            $region33: #{global_context.3} parent=27 // pred_check
              _
            $region34: #{global_context.3} parent=27 // pred_check_branch
              %148 = sbr.rel target = $region36
            $region35: #{global_context.3} parent=27 // pred_region
              %s150 = ssub.s32 256, 1
              loop: start=0, step=1, limit=1
              $region37: #{global_context.3} parent=35 // loop_pre_header
                _
              $region38: #{global_context.3} parent=35 // loop_header
                %s152 = sphi 0, %s156
                %p153 = scmp.ge.s32.totalorder %s152, 1
                %s157 = sphi %s142, %s142
                %s158 = sphi %s138, %s138
              $region39: #{global_context.3} parent=35 // loop_header_branch
                %155 = sbr.rel (%p153) target = $region43
              $region40: #{global_context.3} parent=35 // loop_body
                %v159 = vld [vmem:[%s157] sm:%s150]
                %160 = vst [vmem:[%s158] sm:%s150] %v159
                %v161 = vld [vmem:[%s157 + $0x28] sm:%s150]
                %162 = vst [vmem:[%s158 + $0x8] sm:%s150] %v161
                %v163 = vld [vmem:[%s157 + $0x50] sm:%s150]
                %164 = vst [vmem:[%s158 + $0x10] sm:%s150] %v163
                %v165 = vld [vmem:[%s157 + $0x78] sm:%s150]
                %166 = vst [vmem:[%s158 + $0x18] sm:%s150] %v165
              $region41: #{global_context.3} parent=35 // loop_footer
                %s156 = sadd.s32 1, %s152
              $region42: #{global_context.3} parent=35 // loop_footer_branch
                %151 = sbr.rel target = $region38
              $region43: #{global_context.3} parent=35 // loop_exit
                _
            $region36: #{global_context.3} parent=27 // pred_fallthru
              _
          $region28: #{global_context.3} parent=23 // pred_fallthru
            _
          %187 = vnop
        $region24: #{global_context.3} parent=15 // pred_fallthru
          _
      $region16: #{global_context.3} parent=5 // pred_fallthru
        _
      %p188 = scmp.le.s32.totalorder 1, %s11
      %p189 = scmp.lt.s32.totalorder %s11, 11
      %p190 = pnand %p188, %p189
      %p191 = pneg %p190
      // Predicated region
      $region59: #{global_context.3} parent=5 // pred_check
        _
      $region60: #{global_context.3} parent=5 // pred_check_branch
        %193 = sbr.rel (%p190) target = $region62
      $region61: #{global_context.3} parent=5 // pred_region
        %s194 = ssub.s32 %s11, 1
        %s195 = sand.u32 %s64, 1
        %s196 = sand.u32 %s64, 1
        %s197 = smul.addr %s196, 32
        %s198 = scalar_lea.vmem [#allocation2], %s197
        // Predicated region
        $region63: #{global_context.3} parent=61 // pred_check
          %p199 = pneg %p77
        $region64: #{global_context.3} parent=61 // pred_check_branch
          %201 = sbr.rel (%p199) target = $region66
        $region65: #{global_context.3} parent=61 // pred_region
          _
        $region66: #{global_context.3} parent=61 // pred_fallthru
          _
        %p202 = scmp.lt.s32.totalorder %s20, 1
        %s203 = scalar_select %p202, %s20, 1
        %s204 = smul.addr %s203, 4
        %s205 = smul.addr %s204, 8
        %s206 = scalar_lea.vmem %s0, %s205
        %p207 = pneg %p49
        %p208 = pneg %p46
        %s209 = sand.u32 %s64, 1
        %s210 = sand.u32 %s64, 1
        %s211 = smul.addr %s210, 32
        %s212 = scalar_lea.vmem [#allocation2], %s211
        %p213 = pneg %p77
        %p214 = pneg %p74
        %p215 = pneg %p105
        %p216 = pneg %p102
        %s217 = sand.u32 %s92, 1
        %s218 = scalar_lea.sflag [#allocation4], %s217
        %s219 = sand.u32 %s92, 1
        %s220 = smul.addr %s219, 32
        %s221 = scalar_lea.vmem [#allocation3], %s220
        %p222 = scmp.lt.s32.totalorder %s20, 1
        %s223 = scalar_select %p222, %s20, 1
        %s224 = smul.addr %s223, 4
        %s225 = smul.addr %s224, 8
        %s226 = scalar_lea.vmem %s0, %s225
        %v227 = vld [vmem:[%s226] sm:$0xff]
        %v228 = vld [vmem:[%s226 + $0x8] sm:$0xff]
        %v229 = vld [vmem:[%s226 + $0x10] sm:$0xff]
        %v230 = vld [vmem:[%s226 + $0x18] sm:$0xff]
        %v231 = vld [vmem:[%s198] sm:$0xff]
        %v232 = vld [vmem:[%s198 + $0x8] sm:$0xff]
        %v233 = vld [vmem:[%s198 + $0x10] sm:$0xff]
        %v234 = vld [vmem:[%s198 + $0x18] sm:$0xff]
        %236 = vset.pattern.permute.xlu0 0
        %237 = vperm.xlu0 %236, %v227
        %v238 = vpop.permute.xlu0 %237
        %241 = vset.pattern.permute.xlu0 0
        %242 = vperm.xlu0 %241, %v228
        %v243 = vpop.permute.xlu0 %242
        %246 = vset.pattern.permute.xlu0 0
        %247 = vperm.xlu0 %246, %v229
        %v248 = vpop.permute.xlu0 %247
        %251 = vset.pattern.permute.xlu0 0
        %252 = vperm.xlu0 %251, %v230
        %v253 = vpop.permute.xlu0 %252
        %v255 = vmul.f32 %v238, %v231
        %v256 = vmul.f32 %v243, %v232
        %v257 = vmul.f32 %v248, %v233
        %v258 = vmul.f32 %v253, %v234
        %259 = vst [vmem:[%s221] sm:$0xff] %v255
        %260 = vst [vmem:[%s221 + $0x8] sm:$0xff] %v256
        %261 = vst [vmem:[%s221 + $0x10] sm:$0xff] %v257
        %262 = vst [vmem:[%s221 + $0x18] sm:$0xff] %v258
        %s263 = sand.u32 %s92, 1
        %s264 = scalar_lea.sflag [#allocation4], %s263
        %s265 = sand.u32 %s92, 1
        %s266 = smul.addr %s265, 32
        %s267 = scalar_lea.vmem [#allocation3], %s266
        // Predicated region
        $region67: #{global_context.3} parent=61 // pred_check
          %p268 = pneg %p102
        $region68: #{global_context.3} parent=61 // pred_check_branch
          %270 = sbr.rel (%p268) target = $region70
        $region69: #{global_context.3} parent=61 // pred_region
          %s272 = ssub.s32 512, 512
          %273 = vsyncadd %s264, %s272
          %s274 = smul.addr %s20, 20
          %s275 = sadd.s32 %s21, %s274
          %s276 = smul.addr %s275, 128
          %s277 = scalar_lea.hbm %s2, %s276
          %s278 = sshll.u32 %s267, 4
          %s279 = int_to_ptr.vmem [resolvable:$true] %s278
          %284 = dma.vmem_to_hbm [thread:$0]  %s279, 512, %s277, %s264, 128, 640, 8
        $region70: #{global_context.3} parent=61 // pred_fallthru
          _
      $region62: #{global_context.3} parent=5 // pred_fallthru
        _
      %p285 = scmp.le.s32.totalorder 2, %s11
      // Predicated region
      $region71: #{global_context.3} parent=5 // pred_check
        %p286 = pneg %p285
      $region72: #{global_context.3} parent=5 // pred_check_branch
        %288 = sbr.rel (%p286) target = $region74
      $region73: #{global_context.3} parent=5 // pred_region
        %s289 = ssub.s32 %s11, 2
        // Predicated region
        $region75: #{global_context.3} parent=73 // pred_check
          %p290 = pneg %p108
        $region76: #{global_context.3} parent=73 // pred_check_branch
          %292 = sbr.rel (%p290) target = $region78
        $region77: #{global_context.3} parent=73 // pred_region
          %s293 = sand.u32 %s93, 1
          %s294 = scalar_lea.sflag [#allocation4], %s293
          %s295 = sand.u32 %s93, 1
          %s296 = smul.addr %s295, 32
          %s297 = scalar_lea.vmem [#allocation3], %s296
          %298 = dma.done %s294, 512
        $region78: #{global_context.3} parent=73 // pred_fallthru
          _
      $region74: #{global_context.3} parent=5 // pred_fallthru
        _
    $region6: #{global_context.3} parent=1 // loop_footer
      %s15 = sadd.s32 1, %s11
    $region7: #{global_context.3} parent=1 // loop_footer_branch
      %10 = sbr.rel target = $region3
    $region8: #{global_context.3} parent=1 // loop_exit
      _
    %299 = vsyncpa [#allocation4], 1
    %s300 = scalar_lea.sflag [#allocation4], 1
    %301 = vsyncpa %s300, 1

</llo_original>
